<compile_context>
chip_gen: v6e
topology: v6e:2x2x1
jax: 0.10.0
libtpu: 0.0.40
codegen_flags: <defaults>
</compile_context>

<pallas_src>
import functools

import jax
import jax.numpy as jnp
from jax.experimental import pallas as pl
from jax.experimental.pallas import tpu as pltpu


def _round_up(x, m):
    return (x + m - 1) // m * m


def _cdiv(a, b):
    return (a + b - 1) // b


def _actor_kernel(obs_ref, w1_ref, b1_ref, w2_ref, b2_ref, w3_ref, b3_ref,
                  act_ref, out_ref, *, act_dim):
    """Fused 3-layer MLP + log_softmax + log_prob gather for one batch tile.

    Output slab layout (lane-dense, A_pad lanes = multiple of 128):
      out[:, :act_dim]   = log_softmax(logits)   (normalized logits of pi)
      out[:, act_dim]    = log_prob(act)         (packed into a spare lane)
      out[:, act_dim+1:] = padded junk, sliced off in the wrapper.
    """
    cdt = w1_ref.dtype  # MXU input dtype (bf16 by default, f32 for the check path)

    # --- MLP hot path: MXU matmuls with f32 accumulation, tanh on EUP/VPU ---
    # obs arrives in f32; cast on the VPU (free) instead of a wrapper-side pass.
    x = obs_ref[...].astype(cdt)
    h = jnp.tanh(
        jnp.dot(x, w1_ref[...], preferred_element_type=jnp.float32)
        + b1_ref[...])
    h = jnp.tanh(
        jnp.dot(h.astype(cdt), w2_ref[...], preferred_element_type=jnp.float32)
        + b2_ref[...])
    logits = (jnp.dot(h.astype(cdt), w3_ref[...],
                      preferred_element_type=jnp.float32)
              + b3_ref[...])
    # Padded action columns carry bias = -1e30 -> exp() == 0 there, so the
    # log_softmax of the real columns is unchanged.

    # --- Categorical(logits): normalized log-probs (log_softmax) ---
    m = jnp.max(logits, axis=-1, keepdims=True)
    z = logits - m
    lse = jnp.log(jnp.sum(jnp.exp(z), axis=-1, keepdims=True))
    log_probs = z - lse                                    # [TB, A_pad] f32

    # --- log_prob(act): select-based gather along the lane axis ---
    # (keep the where/select form: a one-hot multiply would hit 0 * -1e30;
    #  out-of-range action indices silently yield 0.0 rather than an error)
    a = act_ref[...]                                       # [TB, 1] int32
    col = jax.lax.broadcasted_iota(jnp.int32, log_probs.shape, 1)
    logp = jnp.sum(jnp.where(col == a, log_probs, 0.0),
                   axis=-1, keepdims=True)                 # [TB, 1]

    # Pack logp into lane `act_dim` so the kernel emits ONE lane-dense store,
    # cast to the (bf16) output dtype at the store.
    out_ref[...] = jnp.where(col == act_dim, logp, log_probs).astype(out_ref.dtype)


def prepare_params(params, *, compute_dtype=jnp.bfloat16):
    """One-time weight prep (amortized across actor calls).

    Pads layer 3 to a lane-dense width (zero weights, -1e30 bias on padded
    columns, one spare lane reserved for logp_a), casts weights to the MXU
    input dtype, keeps biases in f32.
    Returns (prepped_tuple, act_dim).
    """
    (w1, b1), (w2, b2), (w3, b3) = params
    h2, A = w3.shape
    A_pad = _round_up(A + 1, 128)

    w3_p = jnp.zeros((h2, A_pad), jnp.float32).at[:, :A].set(
        w3.astype(jnp.float32))
    b3_p = jnp.full((1, A_pad), -1e30, jnp.float32).at[0, :A].set(
        b3.astype(jnp.float32))

    prepped = (
        w1.astype(compute_dtype),
        b1.reshape(1, -1).astype(jnp.float32),
        w2.astype(compute_dtype),
        b2.reshape(1, -1).astype(jnp.float32),
        w3_p.astype(compute_dtype),
        b3_p,
    )
    return prepped, A


@functools.partial(jax.jit, static_argnames=("act_dim", "compute_dtype"))
def actor_forward(obs, act, prepped, *, act_dim, compute_dtype=jnp.bfloat16):
    """Returns (normalized_logits [B, A], logp_a [B])."""
    w1c, b1r, w2c, b2r, w3c, b3p = prepped
    B, obs_dim = obs.shape
    h1 = w1c.shape[1]
    h2 = w2c.shape[1]
    A_pad = w3c.shape[1]
    A = act_dim

    # bf16 output slab on the fast path (halves the dominant HBM write stream);
    # f32 only for the tight-tolerance check path.
    is_f32 = jnp.dtype(compute_dtype) == jnp.dtype(jnp.float32)
    out_dtype = jnp.float32 if is_f32 else jnp.bfloat16

    # Batch tiling: sublane-aligned, >= 2 tiles whenever B > 8 (keeps both v7x
    # TensorCores busy), capped at 2048 rows to amortize per-grid-step overhead.
    # Per-tile VMEM at TB=2048 is only a couple of MiB even with double buffering.
    TB = min(2048, _round_up(max(_cdiv(B, 2), 1), 8))
    B_pad = _round_up(B, TB)
    n_tiles = B_pad // TB

    if B_pad != B:
        obs_p = jnp.zeros((B_pad, obs_dim), obs.dtype).at[:B].set(obs)
        act_p = jnp.zeros((B_pad,), jnp.int32).at[:B].set(act.astype(jnp.int32))
    else:
        obs_p = obs
        act_p = act.astype(jnp.int32)
    act_p = act_p.reshape(B_pad, 1)

    const = lambda i: (0, 0)      # weights/biases: resident across batch tiles
    batch = lambda i: (i, 0)      # obs/act/out: tiled along the batch axis

    w_itemsize = jnp.dtype(compute_dtype).itemsize
    out_itemsize = jnp.dtype(out_dtype).itemsize
    flops = 2 * B_pad * (obs_dim * h1 + h1 * h2 + h2 * A_pad)
    transcendentals = B_pad * (h1 + h2 + A_pad + 1)
    bytes_accessed = (obs_p.size * obs_p.dtype.itemsize
                      + act_p.size * 4
                      + (w1c.size + w2c.size + w3c.size) * w_itemsize
                      + (b1r.size + b2r.size + b3p.size) * 4
                      + B_pad * A_pad * out_itemsize)

    out = pl.pallas_call(
        functools.partial(_actor_kernel, act_dim=A),
        out_shape=jax.ShapeDtypeStruct((B_pad, A_pad), out_dtype),
        grid=(n_tiles,),
        in_specs=[
            pl.BlockSpec((TB, obs_dim), batch),
            pl.BlockSpec((obs_dim, h1), const),
            pl.BlockSpec((1, h1), const),
            pl.BlockSpec((h1, h2), const),
            pl.BlockSpec((1, h2), const),
            pl.BlockSpec((h2, A_pad), const),
            pl.BlockSpec((1, A_pad), const),
            pl.BlockSpec((TB, 1), batch),
        ],
        out_specs=pl.BlockSpec((TB, A_pad), batch),
        compiler_params=pltpu.CompilerParams(
            dimension_semantics=("parallel",)),
        cost_estimate=pl.CostEstimate(
            flops=flops,
            transcendentals=transcendentals,
            bytes_accessed=bytes_accessed),
    )(obs_p, w1c, b1r, w2c, b2r, w3c, b3p, act_p)

    log_probs = out[:B, :A]       # pi represented by its normalized logits
    logp_a = out[:B, A]           # packed logp lane
    return log_probs, logp_a


def init_params(key, sizes):
    """Deterministic Linear params (Kaiming-uniform-like), shapes [in, out]."""
    params = []
    for j in range(len(sizes) - 1):
        key, kw, kb = jax.random.split(key, 3)
        fan_in = sizes[j]
        bound = 1.0 / jnp.sqrt(fan_in)
        w = jax.random.uniform(kw, (sizes[j], sizes[j + 1]),
                               minval=-bound, maxval=bound, dtype=jnp.float32)
        b = jax.random.uniform(kb, (sizes[j + 1],),
                               minval=-bound, maxval=bound, dtype=jnp.float32)
        params.append((w, b))
    return params


def reference_forward(obs, params, act):
    """Pure-JAX f32 reference for correctness check."""
    (w1, b1), (w2, b2), (w3, b3) = params
    h = jnp.tanh(obs @ w1 + b1)
    h = jnp.tanh(h @ w2 + b2)
    logits = h @ w3 + b3
    log_probs = jax.nn.log_softmax(logits, axis=-1)
    logp_a = jnp.take_along_axis(log_probs, act[:, None], axis=-1)[:, 0]
    return log_probs, logp_a


# TODO(synk): the Categorical distribution *object* (sampling, entropy, ...) has no
# Pallas equivalent here; pi is represented by its normalized logits (log_softmax).

if __name__ == "__main__":
    key = jax.random.PRNGKey(0)
    B, obs_dim, act_dim = 8, 16, 6
    hidden_sizes = (32, 32)

    k_obs, k_act, k_params = jax.random.split(key, 3)
    obs = jax.random.normal(k_obs, (B, obs_dim), dtype=jnp.float32)
    act = jax.random.randint(k_act, (B,), 0, act_dim, dtype=jnp.int32)
    params = init_params(k_params, [obs_dim, *hidden_sizes, act_dim])

    ref_logits, ref_logp = reference_forward(obs, params, act)

    # f32 MXU + f32 output path: tight check of structure / padding / softmax / gather.
    prepped32, A = prepare_params(params, compute_dtype=jnp.float32)
    logits32, logp32 = actor_forward(obs, act, prepped32, act_dim=A,
                                     compute_dtype=jnp.float32)
    jax.block_until_ready((logits32, logp32))
    assert jnp.allclose(logits32, ref_logits, atol=1e-5, rtol=1e-5)
    assert jnp.allclose(logp32, ref_logp, atol=1e-5, rtol=1e-5)

    # bf16 MXU + bf16 output path (default / fast): f32 accumulation in-kernel.
    prepped16, A = prepare_params(params, compute_dtype=jnp.bfloat16)
    logits16, logp16 = actor_forward(obs, act, prepped16, act_dim=A,
                                     compute_dtype=jnp.bfloat16)
    jax.block_until_ready((logits16, logp16))
    assert jnp.allclose(logits16.astype(jnp.float32), ref_logits,
                        atol=3e-2, rtol=3e-2)
    assert jnp.allclose(logp16.astype(jnp.float32), ref_logp,
                        atol=3e-2, rtol=3e-2)

    print("KERNEL_OK")
</pallas_src>

<mosaic_0001>
module attributes {stable_mosaic.version = 11 : i64} {
  func.func @_actor_kernel(%arg0: i32, %arg1: memref<8x16xf32, #tpu.memory_space<vmem>>, %arg2: memref<16x32xf32, #tpu.memory_space<vmem>>, %arg3: memref<1x32xf32, #tpu.memory_space<vmem>>, %arg4: memref<32x32xf32, #tpu.memory_space<vmem>>, %arg5: memref<1x32xf32, #tpu.memory_space<vmem>>, %arg6: memref<32x128xf32, #tpu.memory_space<vmem>>, %arg7: memref<1x128xf32, #tpu.memory_space<vmem>>, %arg8: memref<8x1xi32, #tpu.memory_space<vmem>>, %arg9: memref<8x128xf32, #tpu.memory_space<vmem>>) attributes {dimension_semantics = [#tpu.dimension_semantics<parallel>], iteration_bounds = array<i64: 1>, scalar_prefetch = 0 : i64, scratch_operands = 0 : i64, tpu.core_type = #tpu.core_type<tc>, window_params = [{transform_indices = @transform_0, window_bounds = array<i64: 8, 16>}, {pipeline_mode = #tpu.pipeline_mode<synchronous>, transform_indices = @transform_1, window_bounds = array<i64: 16, 32>}, {pipeline_mode = #tpu.pipeline_mode<synchronous>, transform_indices = @transform_2, window_bounds = array<i64: 1, 32>}, {pipeline_mode = #tpu.pipeline_mode<synchronous>, transform_indices = @transform_3, window_bounds = array<i64: 32, 32>}, {pipeline_mode = #tpu.pipeline_mode<synchronous>, transform_indices = @transform_4, window_bounds = array<i64: 1, 32>}, {pipeline_mode = #tpu.pipeline_mode<synchronous>, transform_indices = @transform_5, window_bounds = array<i64: 32, 128>}, {pipeline_mode = #tpu.pipeline_mode<synchronous>, transform_indices = @transform_6, window_bounds = array<i64: 1, 128>}, {transform_indices = @transform_7, window_bounds = array<i64: 8, 1>}, {transform_indices = @transform_8, window_bounds = array<i64: 8, 128>}]} {
    %c0 = arith.constant 0 : index
    %c0_0 = arith.constant 0 : index
    %0 = vector.load %arg1[%c0, %c0_0] : memref<8x16xf32, #tpu.memory_space<vmem>>, vector<8x16xf32>
    %c0_1 = arith.constant 0 : index
    %c0_2 = arith.constant 0 : index
    %1 = vector.load %arg2[%c0_1, %c0_2] : memref<16x32xf32, #tpu.memory_space<vmem>>, vector<16x32xf32>
    %cst = arith.constant dense<0.000000e+00> : vector<8x32xf32>
    %2 = tpu.matmul %0, %1, %cst {dimension_numbers = #tpu.dot_dimension_numbers<[1], [0], [0], [1], [0, 0, 1, 1], [], []>} : vector<8x16xf32>, vector<16x32xf32>, vector<8x32xf32> -> vector<8x32xf32>
    %c0_3 = arith.constant 0 : index
    %c0_4 = arith.constant 0 : index
    %3 = vector.load %arg3[%c0_3, %c0_4] : memref<1x32xf32, #tpu.memory_space<vmem>>, vector<1x32xf32>
    %4 = vector.broadcast %3 : vector<1x32xf32> to vector<8x32xf32>
    %5 = arith.addf %2, %4 : vector<8x32xf32>
    %6 = math.tanh %5 : vector<8x32xf32>
    %c0_5 = arith.constant 0 : index
    %c0_6 = arith.constant 0 : index
    %7 = vector.load %arg4[%c0_5, %c0_6] : memref<32x32xf32, #tpu.memory_space<vmem>>, vector<32x32xf32>
    %cst_7 = arith.constant dense<0.000000e+00> : vector<8x32xf32>
    %8 = tpu.matmul %6, %7, %cst_7 {dimension_numbers = #tpu.dot_dimension_numbers<[1], [0], [0], [1], [0, 0, 1, 1], [], []>} : vector<8x32xf32>, vector<32x32xf32>, vector<8x32xf32> -> vector<8x32xf32>
    %c0_8 = arith.constant 0 : index
    %c0_9 = arith.constant 0 : index
    %9 = vector.load %arg5[%c0_8, %c0_9] : memref<1x32xf32, #tpu.memory_space<vmem>>, vector<1x32xf32>
    %10 = vector.broadcast %9 : vector<1x32xf32> to vector<8x32xf32>
    %11 = arith.addf %8, %10 : vector<8x32xf32>
    %12 = math.tanh %11 : vector<8x32xf32>
    %c0_10 = arith.constant 0 : index
    %c0_11 = arith.constant 0 : index
    %13 = vector.load %arg6[%c0_10, %c0_11] : memref<32x128xf32, #tpu.memory_space<vmem>>, vector<32x128xf32>
    %cst_12 = arith.constant dense<0.000000e+00> : vector<8x128xf32>
    %14 = tpu.matmul %12, %13, %cst_12 {dimension_numbers = #tpu.dot_dimension_numbers<[1], [0], [0], [1], [0, 0, 1, 1], [], []>} : vector<8x32xf32>, vector<32x128xf32>, vector<8x128xf32> -> vector<8x128xf32>
    %c0_13 = arith.constant 0 : index
    %c0_14 = arith.constant 0 : index
    %15 = vector.load %arg7[%c0_13, %c0_14] : memref<1x128xf32, #tpu.memory_space<vmem>>, vector<1x128xf32>
    %16 = vector.broadcast %15 : vector<1x128xf32> to vector<8x128xf32>
    %17 = arith.addf %14, %16 : vector<8x128xf32>
    %cst_15 = arith.constant dense<0xFF800000> : vector<8xf32>
    %18 = vector.multi_reduction <maximumf>, %17, %cst_15 [1] : vector<8x128xf32> to vector<8xf32>
    %19 = vector.shape_cast %18 : vector<8xf32> to vector<8x1xf32>
    %20 = vector.broadcast %19 : vector<8x1xf32> to vector<8x128xf32>
    %21 = arith.subf %17, %20 : vector<8x128xf32>
    %22 = math.exp %21 : vector<8x128xf32>
    %cst_16 = arith.constant dense<0.000000e+00> : vector<8xf32>
    %23 = vector.multi_reduction <add>, %22, %cst_16 [1] : vector<8x128xf32> to vector<8xf32>
    %24 = vector.shape_cast %23 : vector<8xf32> to vector<8x1xf32>
    %25 = math.log %24 : vector<8x1xf32>
    %26 = vector.broadcast %25 : vector<8x1xf32> to vector<8x128xf32>
    %27 = arith.subf %21, %26 : vector<8x128xf32>
    %c0_17 = arith.constant 0 : index
    %c0_18 = arith.constant 0 : index
    %28 = vector.load %arg8[%c0_17, %c0_18] : memref<8x1xi32, #tpu.memory_space<vmem>>, vector<8x1xi32>
    %29 = tpu.iota {dimensions = array<i32: 1>} : vector<8x128xi32>
    %30 = vector.broadcast %28 : vector<8x1xi32> to vector<8x128xi32>
    %31 = arith.cmpi eq, %29, %30 : vector<8x128xi32>
    %cst_19 = arith.constant 0.000000e+00 : f32
    %32 = vector.broadcast %cst_19 : f32 to vector<8x128xf32>
    %33 = arith.select %31, %27, %32 : vector<8x128xi1>, vector<8x128xf32>
    %cst_20 = arith.constant dense<0.000000e+00> : vector<8xf32>
    %34 = vector.multi_reduction <add>, %33, %cst_20 [1] : vector<8x128xf32> to vector<8xf32>
    %35 = vector.shape_cast %34 : vector<8xf32> to vector<8x1xf32>
    %c6_i32 = arith.constant 6 : i32
    %36 = vector.broadcast %c6_i32 : i32 to vector<8x128xi32>
    %37 = arith.cmpi eq, %29, %36 : vector<8x128xi32>
    %38 = vector.shape_cast %35 : vector<8x1xf32> to vector<8x1xf32>
    %39 = vector.broadcast %38 : vector<8x1xf32> to vector<8x128xf32>
    %40 = arith.select %37, %39, %27 : vector<8x128xi1>, vector<8x128xf32>
    %c0_21 = arith.constant 0 : index
    %c0_22 = arith.constant 0 : index
    %41 = vector.load %arg9[%c0_21, %c0_22] : memref<8x128xf32, #tpu.memory_space<vmem>>, vector<8x128xf32>
    tpu.vector_store %arg9[%c0_21, %c0_22], %40 {strides = array<i32>} : memref<8x128xf32, #tpu.memory_space<vmem>>, vector<8x128xf32>,
    return
  }
  func.func @transform_0(%arg0: i32) -> (i32, i32) {
    %c0_i32 = arith.constant 0 : i32
    %c0_i32_0 = arith.constant 0 : i32
    return %arg0, %c0_i32 : i32, i32
  }
  func.func @transform_1(%arg0: i32) -> (i32, i32) {
    %c0_i32 = arith.constant 0 : i32
    %c0_i32_0 = arith.constant 0 : i32
    %c0_i32_1 = arith.constant 0 : i32
    return %c0_i32, %c0_i32_0 : i32, i32
  }
  func.func @transform_2(%arg0: i32) -> (i32, i32) {
    %c0_i32 = arith.constant 0 : i32
    %c0_i32_0 = arith.constant 0 : i32
    %c0_i32_1 = arith.constant 0 : i32
    return %c0_i32, %c0_i32_0 : i32, i32
  }
  func.func @transform_3(%arg0: i32) -> (i32, i32) {
    %c0_i32 = arith.constant 0 : i32
    %c0_i32_0 = arith.constant 0 : i32
    %c0_i32_1 = arith.constant 0 : i32
    return %c0_i32, %c0_i32_0 : i32, i32
  }
  func.func @transform_4(%arg0: i32) -> (i32, i32) {
    %c0_i32 = arith.constant 0 : i32
    %c0_i32_0 = arith.constant 0 : i32
    %c0_i32_1 = arith.constant 0 : i32
    return %c0_i32, %c0_i32_0 : i32, i32
  }
  func.func @transform_5(%arg0: i32) -> (i32, i32) {
    %c0_i32 = arith.constant 0 : i32
    %c0_i32_0 = arith.constant 0 : i32
    %c0_i32_1 = arith.constant 0 : i32
    return %c0_i32, %c0_i32_0 : i32, i32
  }
  func.func @transform_6(%arg0: i32) -> (i32, i32) {
    %c0_i32 = arith.constant 0 : i32
    %c0_i32_0 = arith.constant 0 : i32
    %c0_i32_1 = arith.constant 0 : i32
    return %c0_i32, %c0_i32_0 : i32, i32
  }
  func.func @transform_7(%arg0: i32) -> (i32, i32) {
    %c0_i32 = arith.constant 0 : i32
    %c0_i32_0 = arith.constant 0 : i32
    return %arg0, %c0_i32 : i32, i32
  }
  func.func @transform_8(%arg0: i32) -> (i32, i32) {
    %c0_i32 = arith.constant 0 : i32
    %c0_i32_0 = arith.constant 0 : i32
    return %arg0, %c0_i32 : i32, i32
  }
}

</mosaic_0001>

<llo_original>
// kernel: actor_forward.1
$region0: #{actor_forward.1}
  #allocation0 [shape = 'u32[]', space=smem, size = 0x4, offset = 0x4, fixed_abs, tag = 'smem constant byte address 0x4 - core index']
  #allocation1 [shape = 'u32[144,128]{1,0:T(1,128)}', space=vmem, size = 0x12000, scoped, tag = 'internal scratch']
  %s0 = inlined_call_operand.vmem [shape: f32[8,16], index: 0, kind: input, shape index: {}]
  %s1 = inlined_call_operand.hbm [shape: f32[16,32], index: 1, kind: input, shape index: {}]
  %s2 = inlined_call_operand.vmem [shape: f32[1,32], index: 2, kind: input, shape index: {}]
  %s3 = inlined_call_operand.hbm [shape: f32[32,32], index: 3, kind: input, shape index: {}]
  %s4 = inlined_call_operand.vmem [shape: f32[1,32], index: 4, kind: input, shape index: {}]
  %s5 = inlined_call_operand.hbm [shape: f32[32,128], index: 5, kind: input, shape index: {}]
  %s6 = inlined_call_operand.vmem [shape: f32[1,128], index: 6, kind: input, shape index: {}]
  %s7 = inlined_call_operand.vmem [shape: s32[8,1], index: 7, kind: input, shape index: {}]
  %s8 = inlined_call_operand.vmem [shape: f32[8,128], index: 8, kind: output, shape index: {}]
  %s9 = sld [smem:[#allocation0]]
  $region54: #{actor_forward.1} parent=0
    _
  %s11 = ssub.s32 1, %s9
  %s12 = scalar_select 0, %s11, %s9
  $region1: #{actor_forward.1} parent=0
    #allocation2 [shape = 'u8[8192]{0}', space=vmem, size = 0x2000, scoped, tag = 'input window, operand 1, single buffered']
    #allocation3 [shape = 's32[1]{0}', space=sflag, size = 0x4, scoped, tag = 'scoped memory for actor_forward.1']
    #allocation4 [shape = 'u8[16384]{0}', space=vmem, size = 0x4000, scoped, tag = 'input window, operand 3, single buffered']
    #allocation5 [shape = 's32[1]{0}', space=sflag, size = 0x4, scoped, tag = 'scoped memory for actor_forward.1']
    #allocation6 [shape = 'u8[16384]{0}', space=vmem, size = 0x4000, scoped, tag = 'input window, operand 5, single buffered']
    %13 = vsyncpa [#allocation3], 0
    %14 = vsyncpa [#allocation5], 0
    // Predicated region
    $region2: #{actor_forward.1} parent=1 // pred_check
      _
    $region3: #{actor_forward.1} parent=1 // pred_check_branch
      %16 = sbr.rel (0) target = $region5
    $region4: #{actor_forward.1} parent=1 // pred_region
      _
    $region5: #{actor_forward.1} parent=1 // pred_fallthru
      _
    // Predicated region
    $region6: #{actor_forward.1} parent=1 // pred_check
      _
    $region7: #{actor_forward.1} parent=1 // pred_check_branch
      %18 = sbr.rel (0) target = $region9
    $region8: #{actor_forward.1} parent=1 // pred_region
      %s20 = ssub.s32 256, 256
      %21 = vsyncadd [#allocation3], %s20
      %s22 = sshll.u32 [#allocation2], 4
      %s23 = int_to_ptr.vmem [resolvable:$true] %s22
      %28 = dma.hbm_to_vmem [thread:$0]  %s1, 256, %s23, [#allocation3], 128, 128, 8
    $region9: #{actor_forward.1} parent=1 // pred_fallthru
      _
    // Predicated region
    $region10: #{actor_forward.1} parent=1 // pred_check
      _
    $region11: #{actor_forward.1} parent=1 // pred_check_branch
      %30 = sbr.rel (0) target = $region13
    $region12: #{actor_forward.1} parent=1 // pred_region
      _
    $region13: #{actor_forward.1} parent=1 // pred_fallthru
      _
    // Predicated region
    $region14: #{actor_forward.1} parent=1 // pred_check
      _
    $region15: #{actor_forward.1} parent=1 // pred_check_branch
      %32 = sbr.rel (0) target = $region17
    $region16: #{actor_forward.1} parent=1 // pred_region
      %s34 = ssub.s32 512, 512
      %35 = vsyncadd [#allocation5], %s34
      %s36 = sshll.u32 [#allocation4], 4
      %s37 = int_to_ptr.vmem [resolvable:$true] %s36
      %42 = dma.hbm_to_vmem [thread:$0]  %s3, 512, %s37, [#allocation5], 128, 128, 8
    $region17: #{actor_forward.1} parent=1 // pred_fallthru
      _
    // Predicated region
    $region18: #{actor_forward.1} parent=1 // pred_check
      _
    $region19: #{actor_forward.1} parent=1 // pred_check_branch
      %44 = sbr.rel (0) target = $region21
    $region20: #{actor_forward.1} parent=1 // pred_region
      _
    $region21: #{actor_forward.1} parent=1 // pred_fallthru
      _
    // Predicated region
    $region22: #{actor_forward.1} parent=1 // pred_check
      _
    $region23: #{actor_forward.1} parent=1 // pred_check_branch
      %46 = sbr.rel (0) target = $region25
    $region24: #{actor_forward.1} parent=1 // pred_region
      %s48 = ssub.s32 512, 512
      %49 = vsyncadd [#allocation5], %s48
      %s50 = sshll.u32 [#allocation6], 4
      %s51 = int_to_ptr.vmem [resolvable:$true] %s50
      %56 = dma.hbm_to_vmem [thread:$0]  %s5, 512, %s51, [#allocation5], 128, 128, 8
    $region25: #{actor_forward.1} parent=1 // pred_fallthru
      _
    // Predicated region
    $region26: #{actor_forward.1} parent=1 // pred_check
      _
    $region27: #{actor_forward.1} parent=1 // pred_check_branch
      %58 = sbr.rel (0) target = $region29
    $region28: #{actor_forward.1} parent=1 // pred_region
      _
    $region29: #{actor_forward.1} parent=1 // pred_fallthru
      _
    // Predicated region
    $region30: #{actor_forward.1} parent=1 // pred_check
      _
    $region31: #{actor_forward.1} parent=1 // pred_check_branch
      %60 = sbr.rel (0) target = $region33
    $region32: #{actor_forward.1} parent=1 // pred_region
      _
    $region33: #{actor_forward.1} parent=1 // pred_fallthru
      _
    // Predicated region
    $region34: #{actor_forward.1} parent=1 // pred_check
      _
    $region35: #{actor_forward.1} parent=1 // pred_check_branch
      %62 = sbr.rel (0) target = $region37
    $region36: #{actor_forward.1} parent=1 // pred_region
      %63 = dma.done [#allocation3], 256
    $region37: #{actor_forward.1} parent=1 // pred_fallthru
      _
    // Predicated region
    $region38: #{actor_forward.1} parent=1 // pred_check
      _
    $region39: #{actor_forward.1} parent=1 // pred_check_branch
      %65 = sbr.rel (0) target = $region41
    $region40: #{actor_forward.1} parent=1 // pred_region
      %66 = dma.done [#allocation5], 512
    $region41: #{actor_forward.1} parent=1 // pred_fallthru
      _
    // Predicated region
    $region42: #{actor_forward.1} parent=1 // pred_check
      _
    $region43: #{actor_forward.1} parent=1 // pred_check_branch
      %68 = sbr.rel (0) target = $region45
    $region44: #{actor_forward.1} parent=1 // pred_region
      %69 = dma.done [#allocation5], 512
    $region45: #{actor_forward.1} parent=1 // pred_fallthru
      _
    %v70 = vld [vmem:[%s0] sm:$0xff]
    %v71 = vld [vmem:[#allocation2] sm:$0xff]
    %v72 = vld [vmem:[#allocation2 + $0x8] sm:$0xff]
    %v73 = vld [vmem:[%s2] sm:$0x1]
    %v75 = vlaneseq
    %v76 = vshrl.u32 %v75, 7
    %v77 = vsub.s32 0, %v76
    %v78 = vrot.slane %v73, %v77
    %vm80 = vcmask 130048
    %v82 = vsel %vm80, %v70, 0
    %84 = vmatprep.subr.mxu0 0.0
    %85 = vmatpush1.msra.mxu0 0.0
    %86 = vmatprep.subr.mxu0 0.0
    %87 = vmatpush1.msra.mxu0 0.0
    %88 = vmatprep.subr.mxu0 0.0
    %89 = vmatpush1.msra.mxu0 0.0
    %90 = vmatprep.subr.mxu0 0.0
    %91 = vmatpush1.msra.mxu0 0.0
    %92 = vmatprep.subr.mxu0 0.0
    %93 = vmatpush1.msra.mxu0 0.0
    %94 = vmatprep.subr.mxu0 0.0
    %95 = vmatpush1.msra.mxu0 0.0
    %96 = vmatprep.subr.mxu0 0.0
    %97 = vmatpush1.msra.mxu0 0.0
    %98 = vmatprep.subr.mxu0 0.0
    %99 = vmatpush1.msra.mxu0 0.0
    %100 = vmatprep.subr.mxu0 0.0
    %101 = vmatpush1.msra.mxu0 0.0
    %102 = vmatprep.subr.mxu0 0.0
    %103 = vmatpush1.msra.mxu0 0.0
    %104 = vmatprep.subr.mxu0 0.0
    %105 = vmatpush1.msra.mxu0 0.0
    %106 = vmatprep.subr.mxu0 0.0
    %107 = vmatpush1.msra.mxu0 0.0
    %108 = vmatprep.subr.mxu0 0.0
    %109 = vmatpush1.msra.mxu0 0.0
    %110 = vmatprep.subr.mxu0 0.0
    %111 = vmatpush1.msra.mxu0 0.0
    %112 = vmatprep.subr.mxu0 0.0
    %113 = vmatpush1.msra.mxu0 %v72
    %114 = vmatprep.subr.mxu0 0.0
    %115 = vmatpush1.msra.mxu0 %v71
    %116 = vmatprep.subr.mxu0 0.0
    %117 = vmatpush2.msra.mxu0 0.0
    %118 = vmatprep.subr.mxu0 0.0
    %119 = vmatpush2.msra.mxu0 0.0
    %120 = vmatprep.subr.mxu0 0.0
    %121 = vmatpush2.msra.mxu0 0.0
    %122 = vmatprep.subr.mxu0 0.0
    %123 = vmatpush2.msra.mxu0 0.0
    %124 = vmatprep.subr.mxu0 0.0
    %125 = vmatpush2.msra.mxu0 0.0
    %126 = vmatprep.subr.mxu0 0.0
    %127 = vmatpush2.msra.mxu0 0.0
    %128 = vmatprep.subr.mxu0 0.0
    %129 = vmatpush2.msra.mxu0 0.0
    %130 = vmatprep.subr.mxu0 0.0
    %131 = vmatpush2.msra.mxu0 0.0
    %132 = vmatprep.subr.mxu0 0.0
    %133 = vmatpush2.msra.mxu0 0.0
    %134 = vmatprep.subr.mxu0 0.0
    %135 = vmatpush2.msra.mxu0 0.0
    %136 = vmatprep.subr.mxu0 0.0
    %137 = vmatpush2.msra.mxu0 0.0
    %138 = vmatprep.subr.mxu0 0.0
    %139 = vmatpush2.msra.mxu0 0.0
    %140 = vmatprep.subr.mxu0 0.0
    %141 = vmatpush2.msra.mxu0 0.0
    %142 = vmatprep.subr.mxu0 0.0
    %143 = vmatpush2.msra.mxu0 0.0
    %144 = vmatprep.subr.mxu0 0.0
    %145 = vmatpush2.msra.mxu0 0.0
    %146 = vmatprep.subr.mxu0 0.0
    %147 = vmatpush2.msra.mxu0 0.0
    %148 = vmatprep.mubr.f32.mxu0 0.0
    %149 = vmatmul.mubr.f32.gmra.mxu0 %v82
    %v150 = vpop.f32.mrf.mxu0
    %v151 = vadd.f32 %v78, %v150
    %v152 = vpop.f32.mrf.mxu0
    %153 = vdwg.mxu0
    %v154 = vtanh.pop %v151
    %v155 = vld [vmem:[#allocation4] sm:$0xff]
    %v156 = vld [vmem:[#allocation4 + $0x8] sm:$0xff]
    %v157 = vld [vmem:[#allocation4 + $0x10] sm:$0xff]
    %v158 = vld [vmem:[#allocation4 + $0x18] sm:$0xff]
    %v159 = vld [vmem:[%s4] sm:$0x1]
    %v161 = vlaneseq
    %v162 = vshrl.u32 %v161, 7
    %v163 = vsub.s32 0, %v162
    %v164 = vrot.slane %v159, %v163
    %vm166 = vcmask 261120
    %v168 = vsel %vm166, %v154, 0
    %170 = vmatprep.subr.mxu0 0.0
    %171 = vmatpush1.msra.mxu0 0.0
    %172 = vmatprep.subr.mxu0 0.0
    %173 = vmatpush1.msra.mxu0 0.0
    %174 = vmatprep.subr.mxu0 0.0
    %175 = vmatpush1.msra.mxu0 0.0
    %176 = vmatprep.subr.mxu0 0.0
    %177 = vmatpush1.msra.mxu0 0.0
    %178 = vmatprep.subr.mxu0 0.0
    %179 = vmatpush1.msra.mxu0 0.0
    %180 = vmatprep.subr.mxu0 0.0
    %181 = vmatpush1.msra.mxu0 0.0
    %182 = vmatprep.subr.mxu0 0.0
    %183 = vmatpush1.msra.mxu0 0.0
    %184 = vmatprep.subr.mxu0 0.0
    %185 = vmatpush1.msra.mxu0 0.0
    %186 = vmatprep.subr.mxu0 0.0
    %187 = vmatpush1.msra.mxu0 0.0
    %188 = vmatprep.subr.mxu0 0.0
    %189 = vmatpush1.msra.mxu0 0.0
    %190 = vmatprep.subr.mxu0 0.0
    %191 = vmatpush1.msra.mxu0 0.0
    %192 = vmatprep.subr.mxu0 0.0
    %193 = vmatpush1.msra.mxu0 0.0
    %194 = vmatprep.subr.mxu0 0.0
    %195 = vmatpush1.msra.mxu0 %v158
    %196 = vmatprep.subr.mxu0 0.0
    %197 = vmatpush1.msra.mxu0 %v157
    %198 = vmatprep.subr.mxu0 0.0
    %199 = vmatpush1.msra.mxu0 %v156
    %200 = vmatprep.subr.mxu0 0.0
    %201 = vmatpush1.msra.mxu0 %v155
    %202 = vmatprep.subr.mxu0 0.0
    %203 = vmatpush2.msra.mxu0 0.0
    %204 = vmatprep.subr.mxu0 0.0
    %205 = vmatpush2.msra.mxu0 0.0
    %206 = vmatprep.subr.mxu0 0.0
    %207 = vmatpush2.msra.mxu0 0.0
    %208 = vmatprep.subr.mxu0 0.0
    %209 = vmatpush2.msra.mxu0 0.0
    %210 = vmatprep.subr.mxu0 0.0
    %211 = vmatpush2.msra.mxu0 0.0
    %212 = vmatprep.subr.mxu0 0.0
    %213 = vmatpush2.msra.mxu0 0.0
    %214 = vmatprep.subr.mxu0 0.0
    %215 = vmatpush2.msra.mxu0 0.0
    %216 = vmatprep.subr.mxu0 0.0
    %217 = vmatpush2.msra.mxu0 0.0
    %218 = vmatprep.subr.mxu0 0.0
    %219 = vmatpush2.msra.mxu0 0.0
    %220 = vmatprep.subr.mxu0 0.0
    %221 = vmatpush2.msra.mxu0 0.0
    %222 = vmatprep.subr.mxu0 0.0
    %223 = vmatpush2.msra.mxu0 0.0
    %224 = vmatprep.subr.mxu0 0.0
    %225 = vmatpush2.msra.mxu0 0.0
    %226 = vmatprep.subr.mxu0 0.0
    %227 = vmatpush2.msra.mxu0 0.0
    %228 = vmatprep.subr.mxu0 0.0
    %229 = vmatpush2.msra.mxu0 0.0
    %230 = vmatprep.subr.mxu0 0.0
    %231 = vmatpush2.msra.mxu0 0.0
    %232 = vmatprep.subr.mxu0 0.0
    %233 = vmatpush2.msra.mxu0 0.0
    %234 = vmatprep.mubr.f32.mxu0 0.0
    %235 = vmatmul.mubr.f32.gmra.mxu0 %v168
    %v236 = vpop.f32.mrf.mxu0
    %v237 = vadd.f32 %v164, %v236
    %v238 = vpop.f32.mrf.mxu0
    %239 = vdwg.mxu0
    %v240 = vtanh.pop %v237
    %v241 = vld [vmem:[#allocation6] sm:$0xff]
    %v242 = vld [vmem:[#allocation6 + $0x8] sm:$0xff]
    %v243 = vld [vmem:[#allocation6 + $0x10] sm:$0xff]
    %v244 = vld [vmem:[#allocation6 + $0x18] sm:$0xff]
    %v245 = vld [vmem:[%s6] sm:$0x1]
    %v247 = vlaneseq
    %v248 = vshrl.u32 %v247, 7
    %v249 = vsub.s32 0, %v248
    %v250 = vrot.slane %v245, %v249
    %v253 = vsel %vm166, %v240, 0
    %255 = vmatprep.subr.mxu0 0.0
    %256 = vmatpush1.msra.mxu0 0.0
    %257 = vmatprep.subr.mxu0 0.0
    %258 = vmatpush1.msra.mxu0 0.0
    %259 = vmatprep.subr.mxu0 0.0
    %260 = vmatpush1.msra.mxu0 0.0
    %261 = vmatprep.subr.mxu0 0.0
    %262 = vmatpush1.msra.mxu0 0.0
    %263 = vmatprep.subr.mxu0 0.0
    %264 = vmatpush1.msra.mxu0 0.0
    %265 = vmatprep.subr.mxu0 0.0
    %266 = vmatpush1.msra.mxu0 0.0
    %267 = vmatprep.subr.mxu0 0.0
    %268 = vmatpush1.msra.mxu0 0.0
    %269 = vmatprep.subr.mxu0 0.0
    %270 = vmatpush1.msra.mxu0 0.0
    %271 = vmatprep.subr.mxu0 0.0
    %272 = vmatpush1.msra.mxu0 0.0
    %273 = vmatprep.subr.mxu0 0.0
    %274 = vmatpush1.msra.mxu0 0.0
    %275 = vmatprep.subr.mxu0 0.0
    %276 = vmatpush1.msra.mxu0 0.0
    %277 = vmatprep.subr.mxu0 0.0
    %278 = vmatpush1.msra.mxu0 0.0
    %279 = vmatprep.subr.mxu0 0.0
    %280 = vmatpush1.msra.mxu0 %v244
    %281 = vmatprep.subr.mxu0 0.0
    %282 = vmatpush1.msra.mxu0 %v243
    %283 = vmatprep.subr.mxu0 0.0
    %284 = vmatpush1.msra.mxu0 %v242
    %285 = vmatprep.subr.mxu0 0.0
    %286 = vmatpush1.msra.mxu0 %v241
    %287 = vmatprep.subr.mxu0 0.0
    %288 = vmatpush2.msra.mxu0 0.0
    %289 = vmatprep.subr.mxu0 0.0
    %290 = vmatpush2.msra.mxu0 0.0
    %291 = vmatprep.subr.mxu0 0.0
    %292 = vmatpush2.msra.mxu0 0.0
    %293 = vmatprep.subr.mxu0 0.0
    %294 = vmatpush2.msra.mxu0 0.0
    %295 = vmatprep.subr.mxu0 0.0
    %296 = vmatpush2.msra.mxu0 0.0
    %297 = vmatprep.subr.mxu0 0.0
    %298 = vmatpush2.msra.mxu0 0.0
    %299 = vmatprep.subr.mxu0 0.0
    %300 = vmatpush2.msra.mxu0 0.0
    %301 = vmatprep.subr.mxu0 0.0
    %302 = vmatpush2.msra.mxu0 0.0
    %303 = vmatprep.subr.mxu0 0.0
    %304 = vmatpush2.msra.mxu0 0.0
    %305 = vmatprep.subr.mxu0 0.0
    %306 = vmatpush2.msra.mxu0 0.0
    %307 = vmatprep.subr.mxu0 0.0
    %308 = vmatpush2.msra.mxu0 0.0
    %309 = vmatprep.subr.mxu0 0.0
    %310 = vmatpush2.msra.mxu0 0.0
    %311 = vmatprep.subr.mxu0 0.0
    %312 = vmatpush2.msra.mxu0 0.0
    %313 = vmatprep.subr.mxu0 0.0
    %314 = vmatpush2.msra.mxu0 0.0
    %315 = vmatprep.subr.mxu0 0.0
    %316 = vmatpush2.msra.mxu0 0.0
    %317 = vmatprep.subr.mxu0 0.0
    %318 = vmatpush2.msra.mxu0 0.0
    %319 = vmatprep.mubr.f32.mxu0 0.0
    %320 = vmatmul.mubr.f32.gmra.mxu0 %v253
    %v321 = vpop.f32.mrf.mxu0
    %v322 = vadd.f32 %v250, %v321
    %v323 = vpop.f32.mrf.mxu0
    %324 = vdwg.mxu0
    %325 = vmax.xlane.f32.xlu0 %v322
    %v326 = vpop.xlane.xlu0 %325
    %v327 = vsub.f32 %v322, %v326
    %v328 = vmul.f32 %v327, 1.442695
    %v329 = vpow.pop %v328
    %330 = vadd.xlane.f32.xlu0 %v329
    %v331 = vpop.xlane.xlu0 %330
    %v332 = vlog2.pop %v331
    %v333 = vmul.f32 %v332, 0.6931472
    %v334 = vsub.f32 %v327, %v333
    %v335 = vld [vmem:[%s7] sm:$0xff]
    %v336 = vlaneseq
    %v337 = vand.u32 %v336, 127
    %338 = vset.pattern.permute.xlu0 0
    %339 = vperm.xlu0 %338, %v335
    %v340 = vpop.permute.xlu0 %339
    %vm341 = vcmp.eq.s32.totalorder %v337, %v340
    %v342 = vsel %vm341, %v334, 0.0
    %343 = vadd.xlane.f32.xlu0 %v342
    %v344 = vpop.xlane.xlu0 %343
    %vm345 = vcmp.eq.s32.totalorder %v337, 6
    %v346 = vsel %vm345, %v344, %v334
    %347 = vst [vmem:[%s8] sm:$0xff] %v346
    // Predicated region
    $region46: #{actor_forward.1} parent=1 // pred_check
      _
    $region47: #{actor_forward.1} parent=1 // pred_check_branch
      %349 = sbr.rel (0) target = $region49
    $region48: #{actor_forward.1} parent=1 // pred_region
      _
    $region49: #{actor_forward.1} parent=1 // pred_fallthru
      _
    // Predicated region
    $region50: #{actor_forward.1} parent=1 // pred_check
      _
    $region51: #{actor_forward.1} parent=1 // pred_check_branch
      %351 = sbr.rel (0) target = $region53
    $region52: #{actor_forward.1} parent=1 // pred_region
      _
    $region53: #{actor_forward.1} parent=1 // pred_fallthru
      _
    %352 = vsyncpa [#allocation3], 1
    %353 = vsyncpa [#allocation5], 1

</llo_original>
